<compile_context>
chip_gen: v5e
topology: v5e:2x2
jax: 0.10.0
libtpu: 0.0.40
codegen_flags: <defaults>
</compile_context>

<pallas_src>
import functools

import numpy as np

import jax
import jax.numpy as jnp
from jax import lax
from jax.experimental import pallas as pl
from jax.experimental.pallas import tpu as pltpu


# ----------------------------------------------------------------------------
# Fused kernel: prepare_infer + tracker update + active mask + get_ori_result
# All query tensors are lane-dense: (rows, Q) with Q on the 128-lane axis.
# ----------------------------------------------------------------------------
def fused_postprocess_kernel(
    logits_ref,        # (NC, Q) f32  VMEM   class logits, channel-major
    coords_ref,        # (4,  Q) f32  VMEM   unsigmoided boxes (cx,cy,w,h)
    obj_ref,           # (1,  Q) i32  VMEM   obj_idxes (state in)
    dis_ref,           # (1,  Q) i32  VMEM   disappear_time (state in)
    mask_ref,          # (1,  Q) i32  VMEM   mask_query
    maxid_ref,         # (1,)    i32  SMEM   max_obj_id (state in)
    scale_ref,         # (4,)    f32  SMEM   image_size_xyxy / scale_factor
    boxes_ref,         # (4,  Q) f32  out    sigmoid center boxes
    scores_ref,        # (1,  Q) f32  out    track scores
    obj_out,           # (1,  Q) i32  out    obj_idxes (state out, aliased)
    dis_out,           # (1,  Q) i32  out    disappear_time (state out, aliased)
    maxid_out,         # (1, 1)  i32  out    max_obj_id (state out)
    active_ref,        # (1,  Q) i32  out    active-track mask
    scaled_boxes_ref,  # (4,  Q) f32  out    scaled corner boxes (x1,y1,x2,y2)
    keep_ref,          # (1,  Q) i32  out    score/area/active keep mask
    *, score_thresh, filter_score_thresh, miss_tolerance,
    prob_threshold, area_threshold):
  q = logits_ref.shape[1]

  # ---- _prepare_infer_process: sigmoids -----------------------------------
  boxes = jax.nn.sigmoid(coords_ref[...])              # (4, Q)
  boxes_ref[...] = boxes
  scores = jax.nn.sigmoid(logits_ref[0:1, :])          # (1, Q) = sigmoid(logit[:,0])
  scores_ref[...] = scores

  # ---- RuntimeTrackerBase.update (vectorized, exact) ----------------------
  valid = mask_ref[...] == 1                            # (1, Q) bool
  obj = obj_ref[...]
  dis = dis_ref[...]
  max_id = maxid_ref[0]

  # disappear_time[scores >= score_thresh] = 0   (only valid entries tracked)
  hi = valid & (scores >= score_thresh)
  dis = jnp.where(hi, 0, dis)

  # new-track branch: IDs assigned in query order == max_id + exclusive
  # prefix sum of cond_new.  Prefix sum over the lane axis via a strict
  # lower-triangular matmul (exact: 0/1 values accumulated in f32).
  cond_new = hi & (obj == -1)
  cond_new_f = cond_new.astype(jnp.float32)
  row = lax.broadcasted_iota(jnp.int32, (q, q), 0)      # k index
  col = lax.broadcasted_iota(jnp.int32, (q, q), 1)      # j index
  tri = (row < col).astype(jnp.float32)                 # tri[k, j] = 1 iff k < j
  lhs = jnp.broadcast_to(cond_new_f, (8, q))            # pad sublanes for MXU
  excl = jnp.dot(lhs, tri, preferred_element_type=jnp.float32)[0:1, :]
  new_ids = max_id + excl.astype(jnp.int32)
  obj_new = jnp.where(cond_new, new_ids, obj)

  # miss branch (elif => disjoint from cond_new since it needs obj >= 0)
  cond_miss = valid & (obj >= 0) & (scores < filter_score_thresh)
  dis_new = jnp.where(cond_miss, dis + 1, dis)
  obj_new = jnp.where(cond_miss & (dis_new >= miss_tolerance), -1, obj_new)

  obj_out[...] = obj_new
  dis_out[...] = dis_new
  total_new = jnp.sum(cond_new_f, axis=1, keepdims=True)     # (1, 1)
  maxid_out[...] = max_id + total_new.astype(jnp.int32)

  # ---- _select_active_tracks (inference): obj >= 0 & mask_query == 1 ------
  active = (obj_new >= 0) & valid
  active_ref[...] = active.astype(jnp.int32)

  # ---- get_ori_result: center->corner, scale, keep mask -------------------
  cx = boxes[0:1, :]
  cy = boxes[1:2, :]
  w2 = 0.5 * boxes[2:3, :]
  h2 = 0.5 * boxes[3:4, :]
  x1 = (cx - w2) * scale_ref[0]
  y1 = (cy - h2) * scale_ref[1]
  x2 = (cx + w2) * scale_ref[2]
  y2 = (cy + h2) * scale_ref[3]
  scaled_boxes_ref[0:1, :] = x1
  scaled_boxes_ref[1:2, :] = y1
  scaled_boxes_ref[2:3, :] = x2
  scaled_boxes_ref[3:4, :] = y2

  area = (x2 - x1) * (y2 - y1)
  keep = (scores > prob_threshold) & (area > area_threshold) & active
  keep_ref[...] = keep.astype(jnp.int32)


def fused_postprocess_call(logits_cq, coords_cq, obj_row, dis_row, mask_row,
                           max_obj_id, scale_xyxy,
                           score_thresh, filter_score_thresh, miss_tolerance,
                           prob_threshold, area_threshold):
  nc, q = logits_cq.shape
  kernel = functools.partial(
      fused_postprocess_kernel,
      score_thresh=float(score_thresh),
      filter_score_thresh=float(filter_score_thresh),
      miss_tolerance=int(miss_tolerance),
      prob_threshold=float(prob_threshold),
      area_threshold=float(area_threshold),
  )
  vmem = pl.BlockSpec(memory_space=pltpu.MemorySpace.VMEM)
  smem = pl.BlockSpec(memory_space=pltpu.MemorySpace.SMEM)
  # TODO(synk): if this post-process is ever batched over frames, add a
  # leading batch grid axis marked "parallel" so v7x's two TensorCores split it.
  return pl.pallas_call(
      kernel,
      out_shape=(
          jax.ShapeDtypeStruct((4, q), jnp.float32),   # sigmoid center boxes
          jax.ShapeDtypeStruct((1, q), jnp.float32),   # scores
          jax.ShapeDtypeStruct((1, q), jnp.int32),     # obj_idxes
          jax.ShapeDtypeStruct((1, q), jnp.int32),     # disappear_time
          jax.ShapeDtypeStruct((1, 1), jnp.int32),     # max_obj_id
          jax.ShapeDtypeStruct((1, q), jnp.int32),     # active mask
          jax.ShapeDtypeStruct((4, q), jnp.float32),   # scaled corner boxes
          jax.ShapeDtypeStruct((1, q), jnp.int32),     # keep mask
      ),
      in_specs=[vmem, vmem, vmem, vmem, vmem, smem, smem],
      out_specs=(vmem, vmem, vmem, vmem, vmem, vmem, vmem, vmem),
      input_output_aliases={2: 2, 3: 3},   # obj_idxes / disappear_time updated in place
  )(logits_cq, coords_cq, obj_row, dis_row, mask_row, max_obj_id, scale_xyxy)


# ----------------------------------------------------------------------------
# Module wrapper (inference path of MotrPostProcess.forward)
# ----------------------------------------------------------------------------
class MotrPostProcess:
  def __init__(self, max_track=256, area_threshold=100, prob_threshold=0.7,
               random_drop=0.1, fp_ratio=0.3, score_thresh=0.7,
               filter_score_thresh=0.6, miss_tolerance=5):
    self.max_track = max_track
    self.area_threshold = area_threshold
    self.prob_threshold = prob_threshold
    self.random_drop = random_drop
    self.fp_ratio = fp_ratio
    self.score_thresh = score_thresh
    self.filter_score_thresh = filter_score_thresh
    self.miss_tolerance = miss_tolerance
    # TODO(synk): training path (criterion.match_for_single_frame, random
    # drop / fp-track augmentation) needs an external matcher + RNG-driven
    # dynamic instance selection; only the inference path is implemented.

  def __call__(self, track_state, out_hs, outputs_classes_head,
               outputs_coords_head, image_size_xyxy, scale_factor):
    b, c, h, w = out_hs.shape
    q = h * w

    # ---- _head_out_reshape_permute: only the last decoder level is consumed
    # at inference, and channel-major (C, Q) == NCHW flatten needs NO permute
    # for the kernel (queries land on the lane axis).
    cls_last = outputs_classes_head[-1]
    crd_last = outputs_coords_head[-1]
    logits_cq = cls_last.reshape(cls_last.shape[0], cls_last.shape[1], q)[0].astype(jnp.float32)  # (NC, Q)
    coords_cq = crd_last.reshape(crd_last.shape[0], crd_last.shape[1], q)[0].astype(jnp.float32)  # (4, Q)
    hs_cq = out_hs.reshape(b, c, q)[0].astype(jnp.float32)                                        # (C, Q)

    obj_row = track_state["obj_idxes"].astype(jnp.int32).reshape(1, q)
    dis_row = track_state["disappear_time"].astype(jnp.int32).reshape(1, q)
    mask_row = track_state["mask_query"].astype(jnp.int32).reshape(1, q)
    maxid = track_state["max_obj_id"].astype(jnp.int32).reshape(1)
    scale_xyxy = (image_size_xyxy / scale_factor).astype(jnp.float32).reshape(4)

    (boxes_cq, scores_row, obj_row_new, dis_row_new, maxid_new,
     active_row, scaled_cq, keep_row) = fused_postprocess_call(
        logits_cq, coords_cq, obj_row, dis_row, mask_row, maxid, scale_xyxy,
        self.score_thresh, self.filter_score_thresh, self.miss_tolerance,
        self.prob_threshold, self.area_threshold)

    # ---- query-major views for the original output contract (layout glue) --
    scores = scores_row[0]                        # (Q,)
    pred_boxes = boxes_cq.T                       # (Q, 4) sigmoid center boxes
    pred_logits = logits_cq.T                     # (Q, NC)
    pred_boxes_unsig = coords_cq.T                # (Q, 4)
    output_embedding = hs_cq.T                    # (Q, C)
    obj_new = obj_row_new[0]
    dis_new = dis_row_new[0]
    active_mask = active_row[0]
    keep = keep_row[0]
    max_new = maxid_new.reshape(1)

    # TODO(synk): scores.topk(max_track) + padding_tracks need dynamic shapes;
    # represented here by the static-shape `active_mask` / `keep`.
    padding_track_instance = {
        "scores": scores,
        "pred_logits": pred_logits,
        "pred_boxes": pred_boxes,
        "pred_boxes_unsigmoid": pred_boxes_unsig,
        "output_embedding": output_embedding,
        "obj_idxes": obj_new,
        "disappear_time": dis_new,
        "max_obj_id": max_new,
        "mask_query": track_state["mask_query"],
        "active_mask": active_mask,
    }
    padd_len = q - jnp.sum(active_mask)
    frame_outs = {
        "scores": scores,
        "pred_boxes": scaled_cq.T,                # (Q, 4) scaled corner boxes
        "obj_idxes": obj_new,
        "keep": keep,
    }
    return padding_track_instance, padd_len, frame_outs


# ----------------------------------------------------------------------------
# Pure-Python sequential reference for the tracker update (exactness check)
# ----------------------------------------------------------------------------
def tracker_reference(scores, obj, dis, mask, max_id,
                      score_thresh, filter_score_thresh, miss_tolerance):
  scores = np.asarray(scores, np.float32)
  obj = np.asarray(obj, np.int64).copy()
  dis = np.asarray(dis, np.int64).copy()
  mask = np.asarray(mask)
  st = np.float32(score_thresh)
  fst = np.float32(filter_score_thresh)
  mid = int(max_id)
  for i in range(len(scores)):
    if mask[i] != 1:
      continue
    if scores[i] >= st:
      dis[i] = 0
    if obj[i] == -1 and scores[i] >= st:
      obj[i] = mid
      mid += 1
    elif obj[i] >= 0 and scores[i] < fst:
      dis[i] += 1
      if dis[i] >= miss_tolerance:
        obj[i] = -1
  return obj, dis, mid


# ----------------------------------------------------------------------------
if __name__ == "__main__":
  key = jax.random.PRNGKey(0)
  B, HIDDEN, H, W = 1, 32, 16, 8
  Q = H * W            # 128 combined queries (empty_track_instance ++ track_instances)
  NC = 1               # single class (MOT)
  LEVELS = 2

  keys = jax.random.split(key, 1 + 2 * LEVELS)
  out_hs = jax.random.normal(keys[0], (B, HIDDEN, H, W), jnp.float32)
  outputs_classes_head = [
      jax.random.normal(keys[1 + l], (B, NC, H, W), jnp.float32) for l in range(LEVELS)
  ]
  outputs_coords_head = [
      jax.random.normal(keys[1 + LEVELS + l], (B, 4, H, W), jnp.float32) for l in range(LEVELS)
  ]

  # Deterministic synthetic track state (combine of empty + carried tracks).
  n_empty = Q // 2
  carried = jnp.arange(Q - n_empty, dtype=jnp.int32)
  obj_idxes = jnp.concatenate([
      jnp.full((n_empty,), -1, jnp.int32),
      jnp.where(carried % 3 == 0, -1, carried).astype(jnp.int32),
  ])
  disappear_time = (jnp.arange(Q) % 4).astype(jnp.int32)
  mask_query = jnp.where(jnp.arange(Q) % 7 == 0, 0, 1).astype(jnp.int32)
  max_obj_id = jnp.array([100], jnp.int32)

  track_state = {
      "obj_idxes": obj_idxes,
      "disappear_time": disappear_time,
      "mask_query": mask_query,
      "max_obj_id": max_obj_id,
  }

  image_size_xyxy = jnp.array([W * 32.0, H * 32.0, W * 32.0, H * 32.0], jnp.float32)
  scale_factor = jnp.array([0.5, 0.5, 0.5, 0.5], jnp.float32)

  post = MotrPostProcess()
  padding_track_instance, padd_len, frame_outs = post(
      track_state, out_hs, outputs_classes_head, outputs_coords_head,
      image_size_xyxy, scale_factor)
  jax.block_until_ready((padding_track_instance, padd_len, frame_outs))

  # Exactness check: vectorized prefix-sum tracker vs sequential reference
  # (uses the kernel-produced scores so comparisons are bit-identical).
  ref_obj, ref_dis, ref_mid = tracker_reference(
      padding_track_instance["scores"], obj_idxes, disappear_time, mask_query,
      int(max_obj_id[0]), post.score_thresh, post.filter_score_thresh,
      post.miss_tolerance)
  assert np.array_equal(np.asarray(padding_track_instance["obj_idxes"]), ref_obj)
  assert np.array_equal(np.asarray(padding_track_instance["disappear_time"]), ref_dis)
  assert int(padding_track_instance["max_obj_id"][0]) == ref_mid

  print("KERNEL_OK")
</pallas_src>

<mosaic_0001>
module attributes {stable_mosaic.version = 11 : i64} {
  func.func @fused_postprocess_kernel(%arg0: memref<1x128xf32, #tpu.memory_space<vmem>>, %arg1: memref<4x128xf32, #tpu.memory_space<vmem>>, %arg2: memref<1x128xi32, #tpu.memory_space<vmem>>, %arg3: memref<1x128xi32, #tpu.memory_space<vmem>>, %arg4: memref<1x128xi32, #tpu.memory_space<vmem>>, %arg5: memref<1xi32, #tpu.memory_space<smem>>, %arg6: memref<4xf32, #tpu.memory_space<smem>>, %arg7: memref<4x128xf32, #tpu.memory_space<vmem>>, %arg8: memref<1x128xf32, #tpu.memory_space<vmem>>, %arg9: memref<1x128xi32, #tpu.memory_space<vmem>>, %arg10: memref<1x128xi32, #tpu.memory_space<vmem>>, %arg11: memref<1x1xi32, #tpu.memory_space<vmem>>, %arg12: memref<1x128xi32, #tpu.memory_space<vmem>>, %arg13: memref<4x128xf32, #tpu.memory_space<vmem>>, %arg14: memref<1x128xi32, #tpu.memory_space<vmem>>) attributes {dimension_semantics = [], scalar_prefetch = 0 : i64, scratch_operands = 0 : i64, tpu.core_type = #tpu.core_type<tc>} {
    %c0 = arith.constant 0 : index
    %c0_0 = arith.constant 0 : index
    %0 = vector.load %arg1[%c0, %c0_0] : memref<4x128xf32, #tpu.memory_space<vmem>>, vector<4x128xf32>
    %1 = arith.negf %0 : vector<4x128xf32>
    %2 = math.exp %1 : vector<4x128xf32>
    %cst = arith.constant 1.000000e+00 : f32
    %3 = vector.broadcast %cst : f32 to vector<4x128xf32>
    %4 = arith.addf %3, %2 : vector<4x128xf32>
    %5 = arith.divf %3, %4 : vector<4x128xf32>
    %c0_1 = arith.constant 0 : index
    %c0_2 = arith.constant 0 : index
    %6 = vector.load %arg7[%c0_1, %c0_2] : memref<4x128xf32, #tpu.memory_space<vmem>>, vector<4x128xf32>
    tpu.vector_store %arg7[%c0_1, %c0_2], %5 {strides = array<i32>} : memref<4x128xf32, #tpu.memory_space<vmem>>, vector<4x128xf32>,
    %c0_3 = arith.constant 0 : index
    %c0_4 = arith.constant 0 : index
    %7 = vector.load %arg0[%c0_3, %c0_4] : memref<1x128xf32, #tpu.memory_space<vmem>>, vector<1x128xf32>
    %8 = arith.negf %7 : vector<1x128xf32>
    %9 = math.exp %8 : vector<1x128xf32>
    %cst_5 = arith.constant 1.000000e+00 : f32
    %10 = vector.broadcast %cst_5 : f32 to vector<1x128xf32>
    %11 = arith.addf %10, %9 : vector<1x128xf32>
    %12 = arith.divf %10, %11 : vector<1x128xf32>
    %c0_6 = arith.constant 0 : index
    %c0_7 = arith.constant 0 : index
    %13 = vector.load %arg8[%c0_6, %c0_7] : memref<1x128xf32, #tpu.memory_space<vmem>>, vector<1x128xf32>
    tpu.vector_store %arg8[%c0_6, %c0_7], %12 {strides = array<i32>} : memref<1x128xf32, #tpu.memory_space<vmem>>, vector<1x128xf32>,
    %c0_8 = arith.constant 0 : index
    %c0_9 = arith.constant 0 : index
    %14 = vector.load %arg4[%c0_8, %c0_9] : memref<1x128xi32, #tpu.memory_space<vmem>>, vector<1x128xi32>
    %c1_i32 = arith.constant 1 : i32
    %15 = vector.broadcast %c1_i32 : i32 to vector<1x128xi32>
    %16 = arith.cmpi eq, %14, %15 : vector<1x128xi32>
    %c0_10 = arith.constant 0 : index
    %c0_11 = arith.constant 0 : index
    %17 = vector.load %arg2[%c0_10, %c0_11] : memref<1x128xi32, #tpu.memory_space<vmem>>, vector<1x128xi32>
    %c0_12 = arith.constant 0 : index
    %c0_13 = arith.constant 0 : index
    %18 = vector.load %arg3[%c0_12, %c0_13] : memref<1x128xi32, #tpu.memory_space<vmem>>, vector<1x128xi32>
    %c0_14 = arith.constant 0 : index
    %19 = memref.load %arg5[%c0_14] : memref<1xi32, #tpu.memory_space<smem>>
    %cst_15 = arith.constant 0.699999988 : f32
    %20 = vector.broadcast %cst_15 : f32 to vector<1x128xf32>
    %21 = arith.cmpf oge, %12, %20 : vector<1x128xf32>
    %22 = arith.andi %16, %21 : vector<1x128xi1>
    %c0_i32 = arith.constant 0 : i32
    %23 = vector.broadcast %c0_i32 : i32 to vector<1x128xi32>
    %24 = arith.select %22, %23, %18 : vector<1x128xi1>, vector<1x128xi32>
    %c-1_i32 = arith.constant -1 : i32
    %25 = vector.broadcast %c-1_i32 : i32 to vector<1x128xi32>
    %26 = arith.cmpi eq, %17, %25 : vector<1x128xi32>
    %27 = arith.andi %22, %26 : vector<1x128xi1>
    %28 = arith.extui %27 : vector<1x128xi1> to vector<1x128xi32>
    %29 = arith.sitofp %28 : vector<1x128xi32> to vector<1x128xf32>
    %30 = tpu.iota {dimensions = array<i32: 0>} : vector<128x128xi32>
    %31 = tpu.iota {dimensions = array<i32: 1>} : vector<128x128xi32>
    %32 = arith.cmpi slt, %30, %31 : vector<128x128xi32>
    %33 = arith.extui %32 : vector<128x128xi1> to vector<128x128xi32>
    %34 = arith.sitofp %33 : vector<128x128xi32> to vector<128x128xf32>
    %35 = vector.shape_cast %29 : vector<1x128xf32> to vector<1x128xf32>
    %36 = vector.broadcast %35 : vector<1x128xf32> to vector<8x128xf32>
    %cst_16 = arith.constant dense<0.000000e+00> : vector<8x128xf32>
    %37 = tpu.matmul %36, %34, %cst_16 {dimension_numbers = #tpu.dot_dimension_numbers<[1], [0], [0], [1], [0, 0, 1, 1], [], []>} : vector<8x128xf32>, vector<128x128xf32>, vector<8x128xf32> -> vector<8x128xf32>
    %38 = vector.extract_strided_slice %37 {offsets = [0, 0], sizes = [1, 128], strides = [1, 1]} : vector<8x128xf32> to vector<1x128xf32>
    %39 = arith.fptosi %38 : vector<1x128xf32> to vector<1x128xi32>
    %40 = vector.broadcast %19 : i32 to vector<1x128xi32>
    %41 = arith.addi %40, %39 : vector<1x128xi32>
    %42 = arith.select %27, %41, %17 : vector<1x128xi1>, vector<1x128xi32>
    %c0_i32_17 = arith.constant 0 : i32
    %43 = vector.broadcast %c0_i32_17 : i32 to vector<1x128xi32>
    %44 = arith.cmpi sge, %17, %43 : vector<1x128xi32>
    %45 = arith.andi %16, %44 : vector<1x128xi1>
    %cst_18 = arith.constant 6.000000e-01 : f32
    %46 = vector.broadcast %cst_18 : f32 to vector<1x128xf32>
    %47 = arith.cmpf olt, %12, %46 : vector<1x128xf32>
    %48 = arith.andi %45, %47 : vector<1x128xi1>
    %c1_i32_19 = arith.constant 1 : i32
    %49 = vector.broadcast %c1_i32_19 : i32 to vector<1x128xi32>
    %50 = arith.addi %24, %49 : vector<1x128xi32>
    %51 = arith.select %48, %50, %24 : vector<1x128xi1>, vector<1x128xi32>
    %c5_i32 = arith.constant 5 : i32
    %52 = vector.broadcast %c5_i32 : i32 to vector<1x128xi32>
    %53 = arith.cmpi sge, %51, %52 : vector<1x128xi32>
    %54 = arith.andi %48, %53 : vector<1x128xi1>
    %c-1_i32_20 = arith.constant -1 : i32
    %55 = vector.broadcast %c-1_i32_20 : i32 to vector<1x128xi32>
    %56 = arith.select %54, %55, %42 : vector<1x128xi1>, vector<1x128xi32>
    %c0_21 = arith.constant 0 : index
    %c0_22 = arith.constant 0 : index
    %57 = vector.load %arg9[%c0_21, %c0_22] : memref<1x128xi32, #tpu.memory_space<vmem>>, vector<1x128xi32>
    tpu.vector_store %arg9[%c0_21, %c0_22], %56 {strides = array<i32>} : memref<1x128xi32, #tpu.memory_space<vmem>>, vector<1x128xi32>,
    %c0_23 = arith.constant 0 : index
    %c0_24 = arith.constant 0 : index
    %58 = vector.load %arg10[%c0_23, %c0_24] : memref<1x128xi32, #tpu.memory_space<vmem>>, vector<1x128xi32>
    tpu.vector_store %arg10[%c0_23, %c0_24], %51 {strides = array<i32>} : memref<1x128xi32, #tpu.memory_space<vmem>>, vector<1x128xi32>,
    %cst_25 = arith.constant dense<0.000000e+00> : vector<1xf32>
    %59 = vector.multi_reduction <add>, %29, %cst_25 [1] : vector<1x128xf32> to vector<1xf32>
    %60 = vector.shape_cast %59 : vector<1xf32> to vector<1x1xf32>
    %61 = arith.fptosi %60 : vector<1x1xf32> to vector<1x1xi32>
    %62 = vector.broadcast %19 : i32 to vector<1x1xi32>
    %63 = arith.addi %62, %61 : vector<1x1xi32>
    %c0_26 = arith.constant 0 : index
    %c0_27 = arith.constant 0 : index
    %64 = vector.load %arg11[%c0_26, %c0_27] : memref<1x1xi32, #tpu.memory_space<vmem>>, vector<1x1xi32>
    tpu.vector_store %arg11[%c0_26, %c0_27], %63 {strides = array<i32>} : memref<1x1xi32, #tpu.memory_space<vmem>>, vector<1x1xi32>,
    %c0_i32_28 = arith.constant 0 : i32
    %65 = vector.broadcast %c0_i32_28 : i32 to vector<1x128xi32>
    %66 = arith.cmpi sge, %56, %65 : vector<1x128xi32>
    %67 = arith.andi %66, %16 : vector<1x128xi1>
    %68 = arith.extui %67 : vector<1x128xi1> to vector<1x128xi32>
    %c0_29 = arith.constant 0 : index
    %c0_30 = arith.constant 0 : index
    %69 = vector.load %arg12[%c0_29, %c0_30] : memref<1x128xi32, #tpu.memory_space<vmem>>, vector<1x128xi32>
    tpu.vector_store %arg12[%c0_29, %c0_30], %68 {strides = array<i32>} : memref<1x128xi32, #tpu.memory_space<vmem>>, vector<1x128xi32>,
    %70 = vector.extract_strided_slice %5 {offsets = [0, 0], sizes = [1, 128], strides = [1, 1]} : vector<4x128xf32> to vector<1x128xf32>
    %71 = vector.extract_strided_slice %5 {offsets = [1, 0], sizes = [1, 128], strides = [1, 1]} : vector<4x128xf32> to vector<1x128xf32>
    %72 = vector.extract_strided_slice %5 {offsets = [2, 0], sizes = [1, 128], strides = [1, 1]} : vector<4x128xf32> to vector<1x128xf32>
    %cst_31 = arith.constant 5.000000e-01 : f32
    %73 = vector.broadcast %cst_31 : f32 to vector<1x128xf32>
    %74 = arith.mulf %73, %72 : vector<1x128xf32>
    %75 = vector.extract_strided_slice %5 {offsets = [3, 0], sizes = [1, 128], strides = [1, 1]} : vector<4x128xf32> to vector<1x128xf32>
    %cst_32 = arith.constant 5.000000e-01 : f32
    %76 = vector.broadcast %cst_32 : f32 to vector<1x128xf32>
    %77 = arith.mulf %76, %75 : vector<1x128xf32>
    %78 = arith.subf %70, %74 : vector<1x128xf32>
    %c0_33 = arith.constant 0 : index
    %79 = memref.load %arg6[%c0_33] : memref<4xf32, #tpu.memory_space<smem>>
    %80 = vector.broadcast %79 : f32 to vector<1x128xf32>
    %81 = arith.mulf %78, %80 : vector<1x128xf32>
    %82 = arith.subf %71, %77 : vector<1x128xf32>
    %c1 = arith.constant 1 : index
    %83 = memref.load %arg6[%c1] : memref<4xf32, #tpu.memory_space<smem>>
    %84 = vector.broadcast %83 : f32 to vector<1x128xf32>
    %85 = arith.mulf %82, %84 : vector<1x128xf32>
    %86 = arith.addf %70, %74 : vector<1x128xf32>
    %c2 = arith.constant 2 : index
    %87 = memref.load %arg6[%c2] : memref<4xf32, #tpu.memory_space<smem>>
    %88 = vector.broadcast %87 : f32 to vector<1x128xf32>
    %89 = arith.mulf %86, %88 : vector<1x128xf32>
    %90 = arith.addf %71, %77 : vector<1x128xf32>
    %c3 = arith.constant 3 : index
    %91 = memref.load %arg6[%c3] : memref<4xf32, #tpu.memory_space<smem>>
    %92 = vector.broadcast %91 : f32 to vector<1x128xf32>
    %93 = arith.mulf %90, %92 : vector<1x128xf32>
    %c0_34 = arith.constant 0 : index
    %c0_35 = arith.constant 0 : index
    %94 = vector.load %arg13[%c0_34, %c0_35] : memref<4x128xf32, #tpu.memory_space<vmem>>, vector<1x128xf32>
    tpu.vector_store %arg13[%c0_34, %c0_35], %81 {strides = array<i32>} : memref<4x128xf32, #tpu.memory_space<vmem>>, vector<1x128xf32>,
    %c1_36 = arith.constant 1 : index
    %c0_37 = arith.constant 0 : index
    %95 = vector.load %arg13[%c1_36, %c0_37] : memref<4x128xf32, #tpu.memory_space<vmem>>, vector<1x128xf32>
    tpu.vector_store %arg13[%c1_36, %c0_37], %85 {strides = array<i32>} : memref<4x128xf32, #tpu.memory_space<vmem>>, vector<1x128xf32>,
    %c2_38 = arith.constant 2 : index
    %c0_39 = arith.constant 0 : index
    %96 = vector.load %arg13[%c2_38, %c0_39] : memref<4x128xf32, #tpu.memory_space<vmem>>, vector<1x128xf32>
    tpu.vector_store %arg13[%c2_38, %c0_39], %89 {strides = array<i32>} : memref<4x128xf32, #tpu.memory_space<vmem>>, vector<1x128xf32>,
    %c3_40 = arith.constant 3 : index
    %c0_41 = arith.constant 0 : index
    %97 = vector.load %arg13[%c3_40, %c0_41] : memref<4x128xf32, #tpu.memory_space<vmem>>, vector<1x128xf32>
    tpu.vector_store %arg13[%c3_40, %c0_41], %93 {strides = array<i32>} : memref<4x128xf32, #tpu.memory_space<vmem>>, vector<1x128xf32>,
    %98 = arith.subf %89, %81 : vector<1x128xf32>
    %99 = arith.subf %93, %85 : vector<1x128xf32>
    %100 = arith.mulf %98, %99 : vector<1x128xf32>
    %cst_42 = arith.constant 0.699999988 : f32
    %101 = vector.broadcast %cst_42 : f32 to vector<1x128xf32>
    %102 = arith.cmpf ogt, %12, %101 : vector<1x128xf32>
    %cst_43 = arith.constant 1.000000e+02 : f32
    %103 = vector.broadcast %cst_43 : f32 to vector<1x128xf32>
    %104 = arith.cmpf ogt, %100, %103 : vector<1x128xf32>
    %105 = arith.andi %102, %104 : vector<1x128xi1>
    %106 = arith.andi %105, %67 : vector<1x128xi1>
    %107 = arith.extui %106 : vector<1x128xi1> to vector<1x128xi32>
    %c0_44 = arith.constant 0 : index
    %c0_45 = arith.constant 0 : index
    %108 = vector.load %arg14[%c0_44, %c0_45] : memref<1x128xi32, #tpu.memory_space<vmem>>, vector<1x128xi32>
    tpu.vector_store %arg14[%c0_44, %c0_45], %107 {strides = array<i32>} : memref<1x128xi32, #tpu.memory_space<vmem>>, vector<1x128xi32>,
    return
  }
}

</mosaic_0001>

<llo_original>
// kernel: tpu_custom_call.1
$region0: #{tpu_custom_call.1}
  #allocation0 [shape = 'u32[]', space=smem, size = 0x4, offset = 0x4, fixed_abs, tag = 'smem constant byte address 0x4 - core index']
  #allocation1 [shape = 'u32[72,128]{1,0:T(1,128)}', space=vmem, size = 0x9000, scoped, tag = 'internal scratch']
  #allocation2 [shape = 's32[1]{0:T(128)S(6)}', space=smem, size = 0x200, scoped, tag = 'scoped memory for tpu_custom_call.1']
  %s0 = inlined_call_operand.vmem [shape: f32[1,128], index: 0, kind: input, shape index: {}]
  %s1 = inlined_call_operand.vmem [shape: f32[4,128], index: 1, kind: input, shape index: {}]
  %s2 = inlined_call_operand.hbm [shape: s32[1,128], index: 2, kind: input, shape index: {}, may-alias: {2,9}]
  %s3 = inlined_call_operand.hbm [shape: s32[1,128], index: 3, kind: input, shape index: {}, may-alias: {3,10}]
  %s4 = inlined_call_operand.hbm [shape: s32[1,128], index: 4, kind: input, shape index: {}]
  %s5 = inlined_call_operand.<no memory space> [shape: s32[1], index: 5, kind: input, shape index: {}]
  %s6 = inlined_call_operand.hbm [shape: f32[4], index: 6, kind: input, shape index: {}]
  %s7 = inlined_call_operand.hbm [shape: f32[4,128], index: 7, kind: output, shape index: {0}]
  %s8 = inlined_call_operand.hbm [shape: f32[1,128], index: 8, kind: output, shape index: {1}]
  %s9 = inlined_call_operand.hbm [shape: s32[1,128], index: 9, kind: output, shape index: {2}, may-alias: {2,9}]
  %s10 = inlined_call_operand.hbm [shape: s32[1,128], index: 10, kind: output, shape index: {3}, may-alias: {3,10}]
  %s11 = inlined_call_operand.hbm [shape: s32[1,1], index: 11, kind: output, shape index: {4}]
  %s12 = inlined_call_operand.hbm [shape: s32[1,128], index: 12, kind: output, shape index: {5}]
  %s13 = inlined_call_operand.hbm [shape: f32[4,128], index: 13, kind: output, shape index: {6}]
  %s14 = inlined_call_operand.hbm [shape: s32[1,128], index: 14, kind: output, shape index: {7}]
  %15 = xla_tuple %s7, %s8, %s9, %s10, %s11, %s12, %s13, %s14
  %s16 = sld [smem:[#allocation0]]
  $region110: #{tpu_custom_call.1} parent=0
    _
  %s18 = ssub.s32 1, %s16
  %s19 = scalar_select 0, %s18, %s16
  %20 = sst [smem:[#allocation2]] %s5
  $region1: #{tpu_custom_call.1} parent=0
    #allocation3 [shape = 'u8[512]{0}', space=vmem, size = 0x400, scoped, tag = 'input window, operand 2, single buffered']
    #allocation4 [shape = 's32[1]{0}', space=sflag, size = 0x4, scoped, tag = 'scoped memory for tpu_custom_call.1']
    #allocation5 [shape = 's32[1]{0}', space=sflag, size = 0x4, scoped, tag = 'scoped memory for tpu_custom_call.1']
    #allocation6 [shape = 's32[1]{0}', space=sflag, size = 0x4, scoped, tag = 'scoped memory for tpu_custom_call.1']
    #allocation7 [shape = 'u8[512]{0}', space=vmem, size = 0x400, scoped, tag = 'input window, operand 3, single buffered']
    #allocation8 [shape = 's32[1]{0}', space=sflag, size = 0x4, scoped, tag = 'scoped memory for tpu_custom_call.1']
    #allocation9 [shape = 'u8[512]{0}', space=vmem, size = 0x400, scoped, tag = 'input window, operand 4, single buffered']
    #allocation10 [shape = 'u8[512]{0}', space=smem, size = 0x200, scoped, tag = 'input window, operand 6, single buffered']
    #allocation11 [shape = 'u8[2048]{0}', space=vmem, size = 0x800, scoped, tag = 'output window, operand 0, single buffered']
    #allocation12 [shape = 'u8[512]{0}', space=vmem, size = 0x400, scoped, tag = 'output window, operand 1, single buffered']
    #allocation13 [shape = 's32[1]{0}', space=sflag, size = 0x4, scoped, tag = 'scoped memory for tpu_custom_call.1']
    #allocation14 [shape = 'u8[512]{0}', space=vmem, size = 0x400, scoped, tag = 'output window, operand 2, single buffered']
    #allocation15 [shape = 'u8[512]{0}', space=vmem, size = 0x400, scoped, tag = 'output window, operand 3, single buffered']
    #allocation16 [shape = 's32[1]{0}', space=sflag, size = 0x4, scoped, tag = 'scoped memory for tpu_custom_call.1']
    #allocation17 [shape = 'u8[512]{0}', space=vmem, size = 0x400, scoped, tag = 'output window, operand 4, single buffered']
    #allocation18 [shape = 'u8[512]{0}', space=vmem, size = 0x400, scoped, tag = 'output window, operand 5, single buffered']
    #allocation19 [shape = 's32[1]{0}', space=sflag, size = 0x4, scoped, tag = 'scoped memory for tpu_custom_call.1']
    #allocation20 [shape = 'u8[2048]{0}', space=vmem, size = 0x800, scoped, tag = 'output window, operand 6, single buffered']
    #allocation21 [shape = 'u8[512]{0}', space=vmem, size = 0x400, scoped, tag = 'output window, operand 7, single buffered']
    #allocation22 [shape = 's32[1]{0}', space=sflag, size = 0x4, scoped, tag = 'scoped memory for tpu_custom_call.1']
    %21 = vsyncpa [#allocation4], 0
    %22 = vsyncpa [#allocation8], 0
    %23 = vsyncpa [#allocation6], 0
    %24 = vsyncpa [#allocation5], 0
    %25 = vsyncpa [#allocation13], 0
    %26 = vsyncpa [#allocation16], 0
    %27 = vsyncpa [#allocation19], 0
    %28 = vsyncpa [#allocation22], 0
    // Predicated region
    $region2: #{tpu_custom_call.1} parent=1 // pred_check
      _
    $region3: #{tpu_custom_call.1} parent=1 // pred_check_branch
      %30 = sbr.rel (0) target = $region5
    $region4: #{tpu_custom_call.1} parent=1 // pred_region
      _
    $region5: #{tpu_custom_call.1} parent=1 // pred_fallthru
      _
    // Predicated region
    $region6: #{tpu_custom_call.1} parent=1 // pred_check
      _
    $region7: #{tpu_custom_call.1} parent=1 // pred_check_branch
      %32 = sbr.rel (0) target = $region9
    $region8: #{tpu_custom_call.1} parent=1 // pred_region
      _
    $region9: #{tpu_custom_call.1} parent=1 // pred_fallthru
      _
    // Predicated region
    $region10: #{tpu_custom_call.1} parent=1 // pred_check
      _
    $region11: #{tpu_custom_call.1} parent=1 // pred_check_branch
      %34 = sbr.rel (0) target = $region13
    $region12: #{tpu_custom_call.1} parent=1 // pred_region
      %36 = vsyncadd [#allocation4], 0
      %s38 = sshll.u32 %s2, 4
      %s39 = int_to_ptr.hbm [resolvable:$true] %s38
      %s40 = sshll.u32 [#allocation3], 4
      %s41 = int_to_ptr.vmem [resolvable:$true] %s40
      %43 = dma.hbm_to_vmem [thread:$0]  %s39, 16, %s41, [#allocation4]
    $region13: #{tpu_custom_call.1} parent=1 // pred_fallthru
      _
    // Predicated region
    $region14: #{tpu_custom_call.1} parent=1 // pred_check
      _
    $region15: #{tpu_custom_call.1} parent=1 // pred_check_branch
      %45 = sbr.rel (0) target = $region17
    $region16: #{tpu_custom_call.1} parent=1 // pred_region
      %47 = vsyncadd [#allocation8], 0
      %s49 = sshll.u32 %s3, 4
      %s50 = int_to_ptr.hbm [resolvable:$true] %s49
      %s51 = sshll.u32 [#allocation7], 4
      %s52 = int_to_ptr.vmem [resolvable:$true] %s51
      %54 = dma.hbm_to_vmem [thread:$0]  %s50, 16, %s52, [#allocation8]
    $region17: #{tpu_custom_call.1} parent=1 // pred_fallthru
      _
    // Predicated region
    $region18: #{tpu_custom_call.1} parent=1 // pred_check
      _
    $region19: #{tpu_custom_call.1} parent=1 // pred_check_branch
      %56 = sbr.rel (0) target = $region21
    $region20: #{tpu_custom_call.1} parent=1 // pred_region
      %58 = vsyncadd [#allocation8], 0
      %s60 = sshll.u32 %s4, 4
      %s61 = int_to_ptr.hbm [resolvable:$true] %s60
      %s62 = sshll.u32 [#allocation9], 4
      %s63 = int_to_ptr.vmem [resolvable:$true] %s62
      %65 = dma.hbm_to_vmem [thread:$0]  %s61, 16, %s63, [#allocation8]
    $region21: #{tpu_custom_call.1} parent=1 // pred_fallthru
      _
    // Predicated region
    $region22: #{tpu_custom_call.1} parent=1 // pred_check
      _
    $region23: #{tpu_custom_call.1} parent=1 // pred_check_branch
      %67 = sbr.rel (0) target = $region25
    $region24: #{tpu_custom_call.1} parent=1 // pred_region
      _
    $region25: #{tpu_custom_call.1} parent=1 // pred_fallthru
      _
    // Predicated region
    $region26: #{tpu_custom_call.1} parent=1 // pred_check
      _
    $region27: #{tpu_custom_call.1} parent=1 // pred_check_branch
      %69 = sbr.rel (0) target = $region29
    $region28: #{tpu_custom_call.1} parent=1 // pred_region
      %71 = vsyncadd [#allocation6], 0
      %s73 = sshll.u32 %s6, 4
      %s74 = int_to_ptr.hbm [resolvable:$true] %s73
      %76 = dma.hbm_to_smem %s74, 16, [#allocation10], [#allocation6]
    $region29: #{tpu_custom_call.1} parent=1 // pred_fallthru
      _
    // Predicated region
    $region30: #{tpu_custom_call.1} parent=1 // pred_check
      _
    $region31: #{tpu_custom_call.1} parent=1 // pred_check_branch
      %78 = sbr.rel (0) target = $region33
    $region32: #{tpu_custom_call.1} parent=1 // pred_region
      %80 = dma.done [#allocation4], 16
    $region33: #{tpu_custom_call.1} parent=1 // pred_fallthru
      _
    // Predicated region
    $region34: #{tpu_custom_call.1} parent=1 // pred_check
      _
    $region35: #{tpu_custom_call.1} parent=1 // pred_check_branch
      %82 = sbr.rel (0) target = $region37
    $region36: #{tpu_custom_call.1} parent=1 // pred_region
      %84 = dma.done [#allocation8], 16
    $region37: #{tpu_custom_call.1} parent=1 // pred_fallthru
      _
    // Predicated region
    $region38: #{tpu_custom_call.1} parent=1 // pred_check
      _
    $region39: #{tpu_custom_call.1} parent=1 // pred_check_branch
      %86 = sbr.rel (0) target = $region41
    $region40: #{tpu_custom_call.1} parent=1 // pred_region
      %88 = dma.done [#allocation8], 16
    $region41: #{tpu_custom_call.1} parent=1 // pred_fallthru
      _
    // Predicated region
    $region42: #{tpu_custom_call.1} parent=1 // pred_check
      _
    $region43: #{tpu_custom_call.1} parent=1 // pred_check_branch
      %90 = sbr.rel (0) target = $region45
    $region44: #{tpu_custom_call.1} parent=1 // pred_region
      %92 = dma.done [#allocation6], 16
    $region45: #{tpu_custom_call.1} parent=1 // pred_fallthru
      _
    %93 = sfence
    %v94 = vld [vmem:[%s1] sm:$0xf]
    %v95 = vxor.u32 %v94, 2147483648
    %v96 = vmul.f32 %v95, 1.442695
    %v97 = vpow.pop %v96
    %v98 = vadd.f32 %v97, 1.0
    %v99 = vrcp.pop %v98
    %v100 = vmul.f32 %v98, %v99
    %v101 = vsub.f32 1.0, %v100
    %v102 = vmul.f32 %v99, %v101
    %v103 = vadd.f32 %v99, %v102
    %vm104 = vweird.f32 %v98
    %vm105 = vweird.f32 %v99
    %vm106 = vmor %vm104, %vm105
    %v107 = vsel %vm106, %v99, %v103
    %v108 = vand.u32 2147483647, %v98
    %vm109 = vcmp.eq.f32.partialorder %v108, 8.507059e+37
    %v110 = vand.u32 %v98, 2147483648
    %v111 = vor.u32 1.1754944e-38, %v110
    %v112 = vsel %vm109, %v111, %v107
    %v113 = vmul.f32 1.0, %v112
    %114 = vst [vmem:[#allocation11] sm:$0xf] %v113
    %v115 = vld [vmem:[%s0] sm:$0x1]
    %v116 = vxor.u32 %v115, 2147483648
    %v117 = vmul.f32 %v116, 1.442695
    %v118 = vpow.pop %v117
    %v119 = vadd.f32 %v118, 1.0
    %v120 = vrcp.pop %v119
    %v121 = vmul.f32 %v119, %v120
    %v122 = vsub.f32 1.0, %v121
    %v123 = vmul.f32 %v120, %v122
    %v124 = vadd.f32 %v120, %v123
    %vm125 = vweird.f32 %v119
    %vm126 = vweird.f32 %v120
    %vm127 = vmor %vm125, %vm126
    %v128 = vsel %vm127, %v120, %v124
    %v129 = vand.u32 2147483647, %v119
    %vm130 = vcmp.eq.f32.partialorder %v129, 8.507059e+37
    %v131 = vand.u32 %v119, 2147483648
    %v132 = vor.u32 1.1754944e-38, %v131
    %v133 = vsel %vm130, %v132, %v128
    %v134 = vmul.f32 1.0, %v133
    %135 = vst [vmem:[#allocation12] sm:$0x1] %v134
    %v136 = vld [vmem:[#allocation9] sm:$0x1]
    %vm137 = vcmp.eq.s32.totalorder %v136, 1
    %v138 = vld [vmem:[#allocation3] sm:$0x1]
    %v139 = vld [vmem:[#allocation7] sm:$0x1]
    %s140 = sld [smem:[#allocation2]]
    %vm141 = vcmp.ge.f32.partialorder %v134, 0.7
    %vm142 = vmand %vm137, %vm141
    %v143 = vsel %vm142, 0, %v139
    %vm144 = vcmp.eq.s32.totalorder %v138, 4294967295
    %vm145 = vmand %vm142, %vm144
    %v146 = vsel %vm145, 1, 0
    %v147 = vcvt.s32.f32 %v146
    %v148 = vlaneseq
    %v149 = vshrl.u32 %v148, 7
    %v150 = vadd.s32 %v149, 8
    %v151 = vadd.s32 %v149, 16
    %v152 = vadd.s32 %v149, 24
    %v153 = vadd.s32 %v149, 32
    %v154 = vadd.s32 %v149, 40
    %v155 = vadd.s32 %v149, 48
    %v156 = vadd.s32 %v149, 56
    %v157 = vadd.s32 %v149, 64
    %v158 = vadd.s32 %v149, 72
    %v159 = vadd.s32 %v149, 80
    %v160 = vadd.s32 %v149, 88
    %v161 = vadd.s32 %v149, 96
    %v162 = vadd.s32 %v149, 104
    %v163 = vadd.s32 %v149, 112
    %v164 = vadd.s32 %v149, 120
    %v165 = vlaneseq
    %v166 = vand.u32 %v165, 127
    %vm167 = vcmp.lt.s32.totalorder %v149, %v166
    %vm168 = vcmp.lt.s32.totalorder %v150, %v166
    %vm169 = vcmp.lt.s32.totalorder %v151, %v166
    %vm170 = vcmp.lt.s32.totalorder %v152, %v166
    %vm171 = vcmp.lt.s32.totalorder %v153, %v166
    %vm172 = vcmp.lt.s32.totalorder %v154, %v166
    %vm173 = vcmp.lt.s32.totalorder %v155, %v166
    %vm174 = vcmp.lt.s32.totalorder %v156, %v166
    %vm175 = vcmp.lt.s32.totalorder %v157, %v166
    %vm176 = vcmp.lt.s32.totalorder %v158, %v166
    %vm177 = vcmp.lt.s32.totalorder %v159, %v166
    %vm178 = vcmp.lt.s32.totalorder %v160, %v166
    %vm179 = vcmp.lt.s32.totalorder %v161, %v166
    %vm180 = vcmp.lt.s32.totalorder %v162, %v166
    %vm181 = vcmp.lt.s32.totalorder %v163, %v166
    %vm182 = vcmp.lt.s32.totalorder %v164, %v166
    %v183 = vsel %vm167, 1, 0
    %v184 = vsel %vm168, 1, 0
    %v185 = vsel %vm169, 1, 0
    %v186 = vsel %vm170, 1, 0
    %v187 = vsel %vm171, 1, 0
    %v188 = vsel %vm172, 1, 0
    %v189 = vsel %vm173, 1, 0
    %v190 = vsel %vm174, 1, 0
    %v191 = vsel %vm175, 1, 0
    %v192 = vsel %vm176, 1, 0
    %v193 = vsel %vm177, 1, 0
    %v194 = vsel %vm178, 1, 0
    %v195 = vsel %vm179, 1, 0
    %v196 = vsel %vm180, 1, 0
    %v197 = vsel %vm181, 1, 0
    %v198 = vsel %vm182, 1, 0
    %v199 = vcvt.s32.f32 %v183
    %v200 = vcvt.s32.f32 %v184
    %v201 = vcvt.s32.f32 %v185
    %v202 = vcvt.s32.f32 %v186
    %v203 = vcvt.s32.f32 %v187
    %v204 = vcvt.s32.f32 %v188
    %v205 = vcvt.s32.f32 %v189
    %v206 = vcvt.s32.f32 %v190
    %v207 = vcvt.s32.f32 %v191
    %v208 = vcvt.s32.f32 %v192
    %v209 = vcvt.s32.f32 %v193
    %v210 = vcvt.s32.f32 %v194
    %v211 = vcvt.s32.f32 %v195
    %v212 = vcvt.s32.f32 %v196
    %v213 = vcvt.s32.f32 %v197
    %v214 = vcvt.s32.f32 %v198
    %v216 = vperm.slane %v147, 0
    %218 = vmatpush.msra.mxu0 %v214
    %219 = vmatpush.msra.mxu0 %v213
    %220 = vmatpush.msra.mxu0 %v212
    %221 = vmatpush.msra.mxu0 %v211
    %222 = vmatpush.msra.mxu0 %v210
    %223 = vmatpush.msra.mxu0 %v209
    %224 = vmatpush.msra.mxu0 %v208
    %225 = vmatpush.msra.mxu0 %v207
    %226 = vmatpush.msra.mxu0 %v206
    %227 = vmatpush.msra.mxu0 %v205
    %228 = vmatpush.msra.mxu0 %v204
    %229 = vmatpush.msra.mxu0 %v203
    %230 = vmatpush.msra.mxu0 %v202
    %231 = vmatpush.msra.mxu0 %v201
    %232 = vmatpush.msra.mxu0 %v200
    %233 = vmatpush.msra.mxu0 %v199
    %234 = vmatmul.f32.gmra.mxu0 %v216
    %v235 = vpop.f32.mrf.mxu0
    %v236 = vadd.f32 0.0, %v235
    %237 = vdwg.mxu0
    %v238 = vcvt.f32.s32.to.zero.pseudo %v236
    %v239 = vstv %s140
    %v240 = vadd.s32 %v239, %v238
    %v241 = vsel %vm145, %v240, %v138
    %vm242 = vcmp.ge.s32.totalorder %v138, 0
    %vm243 = vmand %vm137, %vm242
    %vm244 = vcmp.lt.f32.partialorder %v134, 0.6
    %vm245 = vmand %vm243, %vm244
    %v246 = vadd.s32 %v143, 1
    %v247 = vsel %vm245, %v246, %v143
    %vm248 = vcmp.ge.s32.totalorder %v247, 5
    %vm249 = vmand %vm245, %vm248
    %v250 = vsel %vm249, 4294967295, %v241
    %251 = vst [vmem:[#allocation14] sm:$0x1] %v250
    %252 = vst [vmem:[#allocation15] sm:$0x1] %v247
    %vm253 = vcmask 1040384
    %v254 = vsel %vm253, %v147, 0.0
    %255 = vadd.xlane.f32.xlu0 %v254
    %v256 = vpop.xlane.xlu0 %255
    %v257 = vcvt.f32.s32.to.zero.pseudo %v256
    %v258 = vadd.s32 %v239, %v257
    %vm259 = vcmask 0
    %260 = vst.msk [vmem:[#allocation17] sm:$0x1] %vm259, %v258
    %vm261 = vcmp.ge.s32.totalorder %v250, 0
    %vm262 = vmand %vm261, %vm137
    %v263 = vsel %vm262, 1, 0
    %264 = vst [vmem:[#allocation18] sm:$0x1] %v263
    %v265 = vmul.f32 %v113, 0.5
    %v267 = vrot.slane %v265, 2
    %v269 = vsub.f32 %v113, %v267
    %s270 = sld [smem:[#allocation10]]
    %v271 = vstv %s270
    %v272 = vmul.f32 %v269, %v271
    %s273 = sld [smem:[#allocation10 + $0x1]]
    %v274 = vstv %s273
    %v275 = vmul.f32 %v269, %v274
    %v276 = vadd.f32 %v113, %v267
    %s277 = sld [smem:[#allocation10 + $0x2]]
    %v278 = vstv %s277
    %v279 = vmul.f32 %v276, %v278
    %s280 = sld [smem:[#allocation10 + $0x3]]
    %v281 = vstv %s280
    %v282 = vmul.f32 %v276, %v281
    %283 = vst [vmem:[#allocation20] sm:$0x1] %v272
    %284 = vst [vmem:[#allocation20] sm:$0x2] %v275
    %285 = vst [vmem:[#allocation20 + $0x2] sm:$0x1] %v279
    %286 = vst [vmem:[#allocation20 + $0x2] sm:$0x2] %v282
    %v287 = vsub.f32 %v279, %v272
    %v288 = vsub.f32 %v282, %v275
    %v290 = vrot.slane %v288, 1
    %v292 = vmul.f32 %v287, %v290
    %vm293 = vcmp.gt.f32.partialorder %v134, 0.7
    %vm294 = vcmp.gt.f32.partialorder %v292, 100.0
    %vm295 = vmand %vm293, %vm294
    %vm296 = vmand %vm295, %vm262
    %v297 = vsel %vm296, 1, 0
    %298 = vst [vmem:[#allocation21] sm:$0x1] %v297
    // Predicated region
    $region46: #{tpu_custom_call.1} parent=1 // pred_check
      _
    $region47: #{tpu_custom_call.1} parent=1 // pred_check_branch
      %300 = sbr.rel (0) target = $region49
    $region48: #{tpu_custom_call.1} parent=1 // pred_region
      %302 = vsyncadd [#allocation5], 0
      %s304 = sshll.u32 [#allocation11], 4
      %s305 = int_to_ptr.vmem [resolvable:$true] %s304
      %s306 = sshll.u32 %s7, 4
      %s307 = int_to_ptr.hbm [resolvable:$true] %s306
      %309 = dma.vmem_to_hbm [thread:$0]  %s305, 64, %s307, [#allocation5]
    $region49: #{tpu_custom_call.1} parent=1 // pred_fallthru
      _
    // Predicated region
    $region50: #{tpu_custom_call.1} parent=1 // pred_check
      _
    $region51: #{tpu_custom_call.1} parent=1 // pred_check_branch
      %311 = sbr.rel (0) target = $region53
    $region52: #{tpu_custom_call.1} parent=1 // pred_region
      %313 = vsyncadd [#allocation13], 0
      %s315 = sshll.u32 [#allocation12], 4
      %s316 = int_to_ptr.vmem [resolvable:$true] %s315
      %s317 = sshll.u32 %s8, 4
      %s318 = int_to_ptr.hbm [resolvable:$true] %s317
      %320 = dma.vmem_to_hbm [thread:$0]  %s316, 16, %s318, [#allocation13]
    $region53: #{tpu_custom_call.1} parent=1 // pred_fallthru
      _
    // Predicated region
    $region54: #{tpu_custom_call.1} parent=1 // pred_check
      _
    $region55: #{tpu_custom_call.1} parent=1 // pred_check_branch
      %322 = sbr.rel (0) target = $region57
    $region56: #{tpu_custom_call.1} parent=1 // pred_region
      %324 = vsyncadd [#allocation13], 0
      %s326 = sshll.u32 [#allocation14], 4
      %s327 = int_to_ptr.vmem [resolvable:$true] %s326
      %s328 = sshll.u32 %s9, 4
      %s329 = int_to_ptr.hbm [resolvable:$true] %s328
      %331 = dma.vmem_to_hbm [thread:$0]  %s327, 16, %s329, [#allocation13]
    $region57: #{tpu_custom_call.1} parent=1 // pred_fallthru
      _
    // Predicated region
    $region58: #{tpu_custom_call.1} parent=1 // pred_check
      _
    $region59: #{tpu_custom_call.1} parent=1 // pred_check_branch
      %333 = sbr.rel (0) target = $region61
    $region60: #{tpu_custom_call.1} parent=1 // pred_region
      %335 = vsyncadd [#allocation16], 0
      %s337 = sshll.u32 [#allocation15], 4
      %s338 = int_to_ptr.vmem [resolvable:$true] %s337
      %s339 = sshll.u32 %s10, 4
      %s340 = int_to_ptr.hbm [resolvable:$true] %s339
      %342 = dma.vmem_to_hbm [thread:$0]  %s338, 16, %s340, [#allocation16]
    $region61: #{tpu_custom_call.1} parent=1 // pred_fallthru
      _
    // Predicated region
    $region62: #{tpu_custom_call.1} parent=1 // pred_check
      _
    $region63: #{tpu_custom_call.1} parent=1 // pred_check_branch
      %344 = sbr.rel (0) target = $region65
    $region64: #{tpu_custom_call.1} parent=1 // pred_region
      %346 = vsyncadd [#allocation16], 0
      %s348 = sshll.u32 [#allocation17], 4
      %s349 = int_to_ptr.vmem [resolvable:$true] %s348
      %s350 = sshll.u32 %s11, 4
      %s351 = int_to_ptr.hbm [resolvable:$true] %s350
      %353 = dma.vmem_to_hbm [thread:$0]  %s349, 16, %s351, [#allocation16]
    $region65: #{tpu_custom_call.1} parent=1 // pred_fallthru
      _
    // Predicated region
    $region66: #{tpu_custom_call.1} parent=1 // pred_check
      _
    $region67: #{tpu_custom_call.1} parent=1 // pred_check_branch
      %355 = sbr.rel (0) target = $region69
    $region68: #{tpu_custom_call.1} parent=1 // pred_region
      %357 = vsyncadd [#allocation19], 0
      %s359 = sshll.u32 [#allocation18], 4
      %s360 = int_to_ptr.vmem [resolvable:$true] %s359
      %s361 = sshll.u32 %s12, 4
      %s362 = int_to_ptr.hbm [resolvable:$true] %s361
      %364 = dma.vmem_to_hbm [thread:$0]  %s360, 16, %s362, [#allocation19]
    $region69: #{tpu_custom_call.1} parent=1 // pred_fallthru
      _
    // Predicated region
    $region70: #{tpu_custom_call.1} parent=1 // pred_check
      _
    $region71: #{tpu_custom_call.1} parent=1 // pred_check_branch
      %366 = sbr.rel (0) target = $region73
    $region72: #{tpu_custom_call.1} parent=1 // pred_region
      %368 = vsyncadd [#allocation19], 0
      %s370 = sshll.u32 [#allocation20], 4
      %s371 = int_to_ptr.vmem [resolvable:$true] %s370
      %s372 = sshll.u32 %s13, 4
      %s373 = int_to_ptr.hbm [resolvable:$true] %s372
      %375 = dma.vmem_to_hbm [thread:$0]  %s371, 64, %s373, [#allocation19]
    $region73: #{tpu_custom_call.1} parent=1 // pred_fallthru
      _
    // Predicated region
    $region74: #{tpu_custom_call.1} parent=1 // pred_check
      _
    $region75: #{tpu_custom_call.1} parent=1 // pred_check_branch
      %377 = sbr.rel (0) target = $region77
    $region76: #{tpu_custom_call.1} parent=1 // pred_region
      %379 = vsyncadd [#allocation22], 0
      %s381 = sshll.u32 [#allocation21], 4
      %s382 = int_to_ptr.vmem [resolvable:$true] %s381
      %s383 = sshll.u32 %s14, 4
      %s384 = int_to_ptr.hbm [resolvable:$true] %s383
      %386 = dma.vmem_to_hbm [thread:$0]  %s382, 16, %s384, [#allocation22]
    $region77: #{tpu_custom_call.1} parent=1 // pred_fallthru
      _
    // Predicated region
    $region78: #{tpu_custom_call.1} parent=1 // pred_check
      _
    $region79: #{tpu_custom_call.1} parent=1 // pred_check_branch
      %388 = sbr.rel (0) target = $region81
    $region80: #{tpu_custom_call.1} parent=1 // pred_region
      %390 = dma.done [#allocation5], 64
    $region81: #{tpu_custom_call.1} parent=1 // pred_fallthru
      _
    // Predicated region
    $region82: #{tpu_custom_call.1} parent=1 // pred_check
      _
    $region83: #{tpu_custom_call.1} parent=1 // pred_check_branch
      %392 = sbr.rel (0) target = $region85
    $region84: #{tpu_custom_call.1} parent=1 // pred_region
      %394 = dma.done [#allocation13], 16
    $region85: #{tpu_custom_call.1} parent=1 // pred_fallthru
      _
    // Predicated region
    $region86: #{tpu_custom_call.1} parent=1 // pred_check
      _
    $region87: #{tpu_custom_call.1} parent=1 // pred_check_branch
      %396 = sbr.rel (0) target = $region89
    $region88: #{tpu_custom_call.1} parent=1 // pred_region
      %398 = dma.done [#allocation13], 16
    $region89: #{tpu_custom_call.1} parent=1 // pred_fallthru
      _
    // Predicated region
    $region90: #{tpu_custom_call.1} parent=1 // pred_check
      _
    $region91: #{tpu_custom_call.1} parent=1 // pred_check_branch
      %400 = sbr.rel (0) target = $region93
    $region92: #{tpu_custom_call.1} parent=1 // pred_region
      %402 = dma.done [#allocation16], 16
    $region93: #{tpu_custom_call.1} parent=1 // pred_fallthru
      _
    // Predicated region
    $region94: #{tpu_custom_call.1} parent=1 // pred_check
      _
    $region95: #{tpu_custom_call.1} parent=1 // pred_check_branch
      %404 = sbr.rel (0) target = $region97
    $region96: #{tpu_custom_call.1} parent=1 // pred_region
      %406 = dma.done [#allocation16], 16
    $region97: #{tpu_custom_call.1} parent=1 // pred_fallthru
      _
    // Predicated region
    $region98: #{tpu_custom_call.1} parent=1 // pred_check
      _
    $region99: #{tpu_custom_call.1} parent=1 // pred_check_branch
      %408 = sbr.rel (0) target = $region101
    $region100: #{tpu_custom_call.1} parent=1 // pred_region
      %410 = dma.done [#allocation19], 16
    $region101: #{tpu_custom_call.1} parent=1 // pred_fallthru
      _
    // Predicated region
    $region102: #{tpu_custom_call.1} parent=1 // pred_check
      _
    $region103: #{tpu_custom_call.1} parent=1 // pred_check_branch
      %412 = sbr.rel (0) target = $region105
    $region104: #{tpu_custom_call.1} parent=1 // pred_region
      %414 = dma.done [#allocation19], 64
    $region105: #{tpu_custom_call.1} parent=1 // pred_fallthru
      _
    // Predicated region
    $region106: #{tpu_custom_call.1} parent=1 // pred_check
      _
    $region107: #{tpu_custom_call.1} parent=1 // pred_check_branch
      %416 = sbr.rel (0) target = $region109
    $region108: #{tpu_custom_call.1} parent=1 // pred_region
      %418 = dma.done [#allocation22], 16
    $region109: #{tpu_custom_call.1} parent=1 // pred_fallthru
      _
    %419 = vsyncpa [#allocation4], 1
    %420 = vsyncpa [#allocation8], 1
    %421 = vsyncpa [#allocation5], 1
    %422 = vsyncpa [#allocation13], 1
    %423 = vsyncpa [#allocation16], 1
    %424 = vsyncpa [#allocation19], 1
    %425 = vsyncpa [#allocation22], 1
    %426 = vsyncpa [#allocation6], 1

</llo_original>
